<compile_context>
chip_gen: v6e
topology: v6e:2x2x1
jax: 0.10.0
libtpu: 0.0.40
codegen_flags: <defaults>
</compile_context>

<pallas_src>
import functools

import jax
import jax.numpy as jnp
from jax import lax
from jax.experimental import pallas as pl
from jax.experimental.pallas import tpu as pltpu


# ---------------------------------------------------------------------------
# Kernel A: fused fc_q / fc_k / fc_v projections over row tiles of [B*L, D].
# ---------------------------------------------------------------------------
def _qkv_proj_kernel(xq_ref, xk_ref, xv_ref,
                     wq_ref, bq_ref, wk_ref, bk_ref, wv_ref, bv_ref,
                     qo_ref, ko_ref, vo_ref, *, compute_dtype):
    def proj(x_ref, w_ref, b_ref, o_ref):
        x = x_ref[...].astype(compute_dtype)
        w = w_ref[...].astype(compute_dtype)
        y = jnp.dot(x, w, preferred_element_type=jnp.float32) + b_ref[...]
        o_ref[...] = y.astype(o_ref.dtype)

    proj(xq_ref, wq_ref, bq_ref, qo_ref)   # wq/bq already carry the 1/scale
    proj(xk_ref, wk_ref, bk_ref, ko_ref)
    proj(xv_ref, wv_ref, bv_ref, vo_ref)


# ---------------------------------------------------------------------------
# Kernel B: head-batched relative-position attention + fused fc_o.
# One grid step = one batch element, all heads, full sequence.
# ---------------------------------------------------------------------------
def _attn_kernel(q_ref, k_ref, v_ref, tk_ref, tv_ref, wo_ref, bo_ref, o_ref,
                 *, max_rel, compute_dtype):
    _, H, L, Dh = q_ref.shape
    D = o_ref.shape[2]
    nb = max_rel + 1           # clip(k-q, -max_rel, 0)+max_rel only hits 0..max_rel

    qh = q_ref[0].astype(compute_dtype)    # [H, L, Dh], already scaled by 1/sqrt(Dh)
    kh = k_ref[0].astype(compute_dtype)
    vh = v_ref[0].astype(compute_dtype)

    # --- content-content scores: batched matmul, contraction over last dims ---
    attn1 = jnp.einsum('hqd,hkd->hqk', qh, kh,
                       preferred_element_type=jnp.float32)          # [H, L, L]

    # --- content-position scores via the bucket-table trick (MXU) ---
    # bucket[h, q, b] = sum_d q[h, q, d] * table_k[b, d]
    tk_used = tk_ref[0:nb, :].astype(compute_dtype)                  # [nb, Dh]
    tkb = jnp.broadcast_to(tk_used, (H, nb, Dh))
    bucket = jnp.einsum('hqd,hbd->hqb', qh, tkb,
                        preferred_element_type=jnp.float32)          # [H, L, nb]

    # clipped relative-distance bucket index: clamp(k-q, -max_rel, 0) + max_rel
    row = lax.broadcasted_iota(jnp.int32, (L, L), 0)   # q
    col = lax.broadcasted_iota(jnp.int32, (L, L), 1)   # k
    idx = jnp.clip(col - row, -max_rel, 0) + max_rel   # values in [0, max_rel]
    causal = col <= row

    attn2 = jnp.zeros((H, L, L), jnp.float32)
    for b in range(nb):                                 # small static unroll
        attn2 = attn2 + jnp.where(idx[None, :, :] == b,
                                  bucket[:, :, b:b + 1], 0.0)

    # --- masked softmax (f32 statistics) ---
    attn = jnp.where(causal[None, :, :], attn1 + attn2, jnp.float32(-1e10))
    m = jnp.max(attn, axis=-1, keepdims=True)
    e = jnp.exp(attn - m)
    s = jnp.sum(e, axis=-1, keepdims=True)
    p = e * pl.reciprocal(s, approx=True)               # EUP reciprocal
    pc = p.astype(compute_dtype)

    # --- content values: batched matmul ---
    w1 = jnp.einsum('hqk,hkd->hqd', pc, vh,
                    preferred_element_type=jnp.float32)              # [H, L, Dh]

    # --- positional values: fold p into buckets, then one tiny MXU matmul ---
    pb = [jnp.sum(jnp.where(idx[None, :, :] == b, p, 0.0), axis=-1)
          for b in range(nb)]                                         # each [H, L]
    p_bucket = jnp.stack(pb, axis=-1)                                 # [H, L, nb]
    tv_used = tv_ref[0:nb, :].astype(compute_dtype)
    tvb = jnp.broadcast_to(tv_used, (H, nb, Dh))
    w2 = jnp.einsum('hqb,hbd->hqd', p_bucket.astype(compute_dtype), tvb,
                    preferred_element_type=jnp.float32)               # [H, L, Dh]

    ctx = (w1 + w2).astype(compute_dtype)                             # [H, L, Dh]

    # --- fused fc_o: out = sum_h ctx[h] @ wo[h*Dh:(h+1)*Dh, :] + bo ---
    acc = jnp.zeros((L, D), jnp.float32)
    for h in range(H):
        acc = acc + jnp.dot(ctx[h], wo_ref[h].astype(compute_dtype),
                            preferred_element_type=jnp.float32)
    o_ref[0] = (acc + bo_ref[...]).astype(o_ref.dtype)   # lane-dense [L, D] write


# ---------------------------------------------------------------------------
# Wrapper
# ---------------------------------------------------------------------------
def _pick_row_block(rows):
    for cand in (512, 256, 128):
        if rows % cand == 0:
            return cand
    return rows


def mha_forward(query, key, value, params, table_k, table_v, n_heads,
                max_rel=5, compute_dtype=jnp.float32):
    B, L, D = query.shape
    Dh = D // n_heads
    rows = B * L

    # Fold 1/sqrt(head_dim) into the query projection (scales attn1 AND attn2).
    scale = jnp.sqrt(jnp.float32(Dh))
    wq = params["wq"] / scale
    bq = params["bq"] / scale

    # ---- Kernel A: projections over [B*L, D] rows (large MXU M) ----
    xq = query.reshape(rows, D)
    xk = key.reshape(rows, D)
    xv = value.reshape(rows, D)

    rb = _pick_row_block(rows)
    row_spec = pl.BlockSpec((rb, D), lambda i: (i, 0))
    w_spec = pl.BlockSpec((D, D), lambda i: (0, 0))
    b_spec = pl.BlockSpec((1, D), lambda i: (0, 0))

    qp, kp, vp = pl.pallas_call(
        functools.partial(_qkv_proj_kernel, compute_dtype=compute_dtype),
        out_shape=(jax.ShapeDtypeStruct((rows, D), compute_dtype),) * 3,
        grid=(rows // rb,),
        in_specs=[row_spec, row_spec, row_spec,
                  w_spec, b_spec, w_spec, b_spec, w_spec, b_spec],
        out_specs=(row_spec, row_spec, row_spec),
        compiler_params=pltpu.CompilerParams(dimension_semantics=("parallel",)),
    )(xq, xk, xv, wq, bq, params["wk"], params["bk"], params["wv"], params["bv"])

    # Layout plumbing in XLA glue (free): split heads -> [B, H, L, Dh].
    def split_heads(x):
        return x.reshape(B, L, n_heads, Dh).transpose(0, 2, 1, 3)

    qh, kh, vh = split_heads(qp), split_heads(kp), split_heads(vp)
    wo_heads = params["wo"].reshape(n_heads, Dh, D)     # per-head slabs of fc_o

    # ---- Kernel B: attention + fused fc_o, grid over batch (megacore) ----
    seq_spec = pl.BlockSpec((1, n_heads, L, Dh), lambda b: (b, 0, 0, 0))
    tab_spec = pl.BlockSpec(table_k.shape, lambda b: (0, 0))
    wo_spec = pl.BlockSpec((n_heads, Dh, D), lambda b: (0, 0, 0))
    bo_spec = pl.BlockSpec((1, D), lambda b: (0, 0))
    out_spec = pl.BlockSpec((1, L, D), lambda b: (b, 0, 0))

    return pl.pallas_call(
        functools.partial(_attn_kernel, max_rel=max_rel,
                          compute_dtype=compute_dtype),
        out_shape=jax.ShapeDtypeStruct((B, L, D), jnp.float32),
        grid=(B,),
        in_specs=[seq_spec, seq_spec, seq_spec,
                  tab_spec, tab_spec, wo_spec, bo_spec],
        out_specs=out_spec,
        compiler_params=pltpu.CompilerParams(dimension_semantics=("parallel",)),
    )(qh, kh, vh, table_k, table_v, wo_heads, params["bo"])


# ---------------------------------------------------------------------------
# Glue used only by the reference: RelativePosition.forward gather
# ---------------------------------------------------------------------------
def relative_embeddings(table, length_q, length_k, max_rel):
    rq = jnp.arange(length_q)
    rk = jnp.arange(length_k)
    dist = rk[None, :] - rq[:, None]
    idx = jnp.clip(dist, -max_rel, 0) + max_rel
    return table[idx]                                     # [Lq, Lk, head_dim]


# ---------------------------------------------------------------------------
# Pure-JAX reference (mirrors the PyTorch forward, eval mode)
# ---------------------------------------------------------------------------
def reference(query, key, value, params, rel_k, rel_v, n_heads):
    B, L, D = query.shape
    Dh = D // n_heads
    qp = query @ params["wq"] + params["bq"]
    kp = key @ params["wk"] + params["bk"]
    vp = value @ params["wv"] + params["bv"]
    rq1 = qp.reshape(B, L, n_heads, Dh).transpose(0, 2, 1, 3)
    rk1 = kp.reshape(B, L, n_heads, Dh).transpose(0, 2, 1, 3)
    rv1 = vp.reshape(B, L, n_heads, Dh).transpose(0, 2, 1, 3)
    attn1 = jnp.einsum("bhqd,bhkd->bhqk", rq1, rk1)
    attn2 = jnp.einsum("bhqd,qkd->bhqk", rq1, rel_k)
    attn = (attn1 + attn2) / jnp.sqrt(jnp.float32(Dh))
    mask = jnp.tril(jnp.ones((L, L)))
    attn = jnp.where(mask == 0, jnp.float32(-1e10), attn)
    attn = jax.nn.softmax(attn, axis=-1)
    w1 = jnp.einsum("bhqk,bhkd->bhqd", attn, rv1)
    w2 = jnp.einsum("bhqk,qkd->bhqd", attn, rel_v)
    x = (w1 + w2).transpose(0, 2, 1, 3).reshape(B, L, D)
    return x @ params["wo"] + params["bo"]


# ---------------------------------------------------------------------------
# Deterministic parameter construction
# ---------------------------------------------------------------------------
def make_params(key, hid_dim, head_dim, max_rel):
    ks = jax.random.split(key, 10)

    def lin_w(k):  # stored as [in, out] so y = x @ W
        bound = 1.0 / jnp.sqrt(hid_dim)
        return jax.random.uniform(k, (hid_dim, hid_dim), jnp.float32, -bound, bound)

    def lin_b(k):
        bound = 1.0 / jnp.sqrt(hid_dim)
        return jax.random.uniform(k, (1, hid_dim), jnp.float32, -bound, bound)

    def xavier_table(k):  # (2*max_rel+1, head_dim)
        shape = (2 * max_rel + 1, head_dim)
        bound = jnp.sqrt(6.0 / (shape[0] + shape[1]))
        return jax.random.uniform(k, shape, jnp.float32, -bound, bound)

    params = {
        "wq": lin_w(ks[0]), "bq": lin_b(ks[1]),
        "wk": lin_w(ks[2]), "bk": lin_b(ks[3]),
        "wv": lin_w(ks[4]), "bv": lin_b(ks[5]),
        "wo": lin_w(ks[6]), "bo": lin_b(ks[7]),
    }
    table_k = xavier_table(ks[8])
    table_v = xavier_table(ks[9])
    return params, table_k, table_v


if __name__ == "__main__":
    B, L, HID, HEADS = 2, 8, 32, 4
    HEAD_DIM = HID // HEADS
    MAX_REL = 5

    key = jax.random.PRNGKey(0)
    kq, kk, kv, kp = jax.random.split(key, 4)
    query = jax.random.normal(kq, (B, L, HID), jnp.float32)
    key_in = jax.random.normal(kk, (B, L, HID), jnp.float32)
    value = jax.random.normal(kv, (B, L, HID), jnp.float32)

    params, table_k, table_v = make_params(kp, HID, HEAD_DIM, MAX_REL)

    # Kernel path (bucket-table trick: only the raw [11, head_dim] tables go in).
    # compute_dtype=jnp.bfloat16 is supported for the MXU matmuls on v6e/v7x.
    out = mha_forward(query, key_in, value, params, table_k, table_v, HEADS,
                      max_rel=MAX_REL, compute_dtype=jnp.float32)
    out = jax.block_until_ready(out)

    # Reference path materializes the gathered relative embeddings.
    rel_k = relative_embeddings(table_k, L, L, MAX_REL)
    rel_v = relative_embeddings(table_v, L, L, MAX_REL)
    ref = reference(query, key_in, value, params, rel_k, rel_v, HEADS)

    assert out.shape == (B, L, HID)
    # Tolerance accounts for the EUP approximate reciprocal in the softmax.
    assert jnp.allclose(out, ref, atol=2e-3, rtol=2e-3), "mismatch vs JAX reference"

    print("KERNEL_OK")
</pallas_src>

<mosaic_0001>
module attributes {stable_mosaic.version = 11 : i64} {
  func.func @_qkv_proj_kernel(%arg0: i32, %arg1: memref<16x32xf32, #tpu.memory_space<vmem>>, %arg2: memref<16x32xf32, #tpu.memory_space<vmem>>, %arg3: memref<16x32xf32, #tpu.memory_space<vmem>>, %arg4: memref<32x32xf32, #tpu.memory_space<vmem>>, %arg5: memref<1x32xf32, #tpu.memory_space<vmem>>, %arg6: memref<32x32xf32, #tpu.memory_space<vmem>>, %arg7: memref<1x32xf32, #tpu.memory_space<vmem>>, %arg8: memref<32x32xf32, #tpu.memory_space<vmem>>, %arg9: memref<1x32xf32, #tpu.memory_space<vmem>>, %arg10: memref<16x32xf32, #tpu.memory_space<vmem>>, %arg11: memref<16x32xf32, #tpu.memory_space<vmem>>, %arg12: memref<16x32xf32, #tpu.memory_space<vmem>>) attributes {dimension_semantics = [#tpu.dimension_semantics<parallel>], iteration_bounds = array<i64: 1>, scalar_prefetch = 0 : i64, scratch_operands = 0 : i64, tpu.core_type = #tpu.core_type<tc>, window_params = [{transform_indices = @transform_0, window_bounds = array<i64: 16, 32>}, {transform_indices = @transform_1, window_bounds = array<i64: 16, 32>}, {transform_indices = @transform_2, window_bounds = array<i64: 16, 32>}, {pipeline_mode = #tpu.pipeline_mode<synchronous>, transform_indices = @transform_3, window_bounds = array<i64: 32, 32>}, {pipeline_mode = #tpu.pipeline_mode<synchronous>, transform_indices = @transform_4, window_bounds = array<i64: 1, 32>}, {pipeline_mode = #tpu.pipeline_mode<synchronous>, transform_indices = @transform_5, window_bounds = array<i64: 32, 32>}, {pipeline_mode = #tpu.pipeline_mode<synchronous>, transform_indices = @transform_6, window_bounds = array<i64: 1, 32>}, {pipeline_mode = #tpu.pipeline_mode<synchronous>, transform_indices = @transform_7, window_bounds = array<i64: 32, 32>}, {pipeline_mode = #tpu.pipeline_mode<synchronous>, transform_indices = @transform_8, window_bounds = array<i64: 1, 32>}, {transform_indices = @transform_9, window_bounds = array<i64: 16, 32>}, {transform_indices = @transform_10, window_bounds = array<i64: 16, 32>}, {transform_indices = @transform_11, window_bounds = array<i64: 16, 32>}]} {
    %c0 = arith.constant 0 : index
    %c0_0 = arith.constant 0 : index
    %0 = vector.load %arg1[%c0, %c0_0] : memref<16x32xf32, #tpu.memory_space<vmem>>, vector<16x32xf32>
    %c0_1 = arith.constant 0 : index
    %c0_2 = arith.constant 0 : index
    %1 = vector.load %arg4[%c0_1, %c0_2] : memref<32x32xf32, #tpu.memory_space<vmem>>, vector<32x32xf32>
    %cst = arith.constant dense<0.000000e+00> : vector<16x32xf32>
    %2 = tpu.matmul %0, %1, %cst {dimension_numbers = #tpu.dot_dimension_numbers<[1], [0], [0], [1], [0, 0, 1, 1], [], []>} : vector<16x32xf32>, vector<32x32xf32>, vector<16x32xf32> -> vector<16x32xf32>
    %c0_3 = arith.constant 0 : index
    %c0_4 = arith.constant 0 : index
    %3 = vector.load %arg5[%c0_3, %c0_4] : memref<1x32xf32, #tpu.memory_space<vmem>>, vector<1x32xf32>
    %4 = vector.broadcast %3 : vector<1x32xf32> to vector<16x32xf32>
    %5 = arith.addf %2, %4 : vector<16x32xf32>
    %c0_5 = arith.constant 0 : index
    %c0_6 = arith.constant 0 : index
    %6 = vector.load %arg10[%c0_5, %c0_6] : memref<16x32xf32, #tpu.memory_space<vmem>>, vector<16x32xf32>
    tpu.vector_store %arg10[%c0_5, %c0_6], %5 {strides = array<i32>} : memref<16x32xf32, #tpu.memory_space<vmem>>, vector<16x32xf32>,
    %c0_7 = arith.constant 0 : index
    %c0_8 = arith.constant 0 : index
    %7 = vector.load %arg2[%c0_7, %c0_8] : memref<16x32xf32, #tpu.memory_space<vmem>>, vector<16x32xf32>
    %c0_9 = arith.constant 0 : index
    %c0_10 = arith.constant 0 : index
    %8 = vector.load %arg6[%c0_9, %c0_10] : memref<32x32xf32, #tpu.memory_space<vmem>>, vector<32x32xf32>
    %cst_11 = arith.constant dense<0.000000e+00> : vector<16x32xf32>
    %9 = tpu.matmul %7, %8, %cst_11 {dimension_numbers = #tpu.dot_dimension_numbers<[1], [0], [0], [1], [0, 0, 1, 1], [], []>} : vector<16x32xf32>, vector<32x32xf32>, vector<16x32xf32> -> vector<16x32xf32>
    %c0_12 = arith.constant 0 : index
    %c0_13 = arith.constant 0 : index
    %10 = vector.load %arg7[%c0_12, %c0_13] : memref<1x32xf32, #tpu.memory_space<vmem>>, vector<1x32xf32>
    %11 = vector.broadcast %10 : vector<1x32xf32> to vector<16x32xf32>
    %12 = arith.addf %9, %11 : vector<16x32xf32>
    %c0_14 = arith.constant 0 : index
    %c0_15 = arith.constant 0 : index
    %13 = vector.load %arg11[%c0_14, %c0_15] : memref<16x32xf32, #tpu.memory_space<vmem>>, vector<16x32xf32>
    tpu.vector_store %arg11[%c0_14, %c0_15], %12 {strides = array<i32>} : memref<16x32xf32, #tpu.memory_space<vmem>>, vector<16x32xf32>,
    %c0_16 = arith.constant 0 : index
    %c0_17 = arith.constant 0 : index
    %14 = vector.load %arg3[%c0_16, %c0_17] : memref<16x32xf32, #tpu.memory_space<vmem>>, vector<16x32xf32>
    %c0_18 = arith.constant 0 : index
    %c0_19 = arith.constant 0 : index
    %15 = vector.load %arg8[%c0_18, %c0_19] : memref<32x32xf32, #tpu.memory_space<vmem>>, vector<32x32xf32>
    %cst_20 = arith.constant dense<0.000000e+00> : vector<16x32xf32>
    %16 = tpu.matmul %14, %15, %cst_20 {dimension_numbers = #tpu.dot_dimension_numbers<[1], [0], [0], [1], [0, 0, 1, 1], [], []>} : vector<16x32xf32>, vector<32x32xf32>, vector<16x32xf32> -> vector<16x32xf32>
    %c0_21 = arith.constant 0 : index
    %c0_22 = arith.constant 0 : index
    %17 = vector.load %arg9[%c0_21, %c0_22] : memref<1x32xf32, #tpu.memory_space<vmem>>, vector<1x32xf32>
    %18 = vector.broadcast %17 : vector<1x32xf32> to vector<16x32xf32>
    %19 = arith.addf %16, %18 : vector<16x32xf32>
    %c0_23 = arith.constant 0 : index
    %c0_24 = arith.constant 0 : index
    %20 = vector.load %arg12[%c0_23, %c0_24] : memref<16x32xf32, #tpu.memory_space<vmem>>, vector<16x32xf32>
    tpu.vector_store %arg12[%c0_23, %c0_24], %19 {strides = array<i32>} : memref<16x32xf32, #tpu.memory_space<vmem>>, vector<16x32xf32>,
    return
  }
  func.func @transform_0(%arg0: i32) -> (i32, i32) {
    %c0_i32 = arith.constant 0 : i32
    %c0_i32_0 = arith.constant 0 : i32
    return %arg0, %c0_i32 : i32, i32
  }
  func.func @transform_1(%arg0: i32) -> (i32, i32) {
    %c0_i32 = arith.constant 0 : i32
    %c0_i32_0 = arith.constant 0 : i32
    return %arg0, %c0_i32 : i32, i32
  }
  func.func @transform_2(%arg0: i32) -> (i32, i32) {
    %c0_i32 = arith.constant 0 : i32
    %c0_i32_0 = arith.constant 0 : i32
    return %arg0, %c0_i32 : i32, i32
  }
  func.func @transform_3(%arg0: i32) -> (i32, i32) {
    %c0_i32 = arith.constant 0 : i32
    %c0_i32_0 = arith.constant 0 : i32
    %c0_i32_1 = arith.constant 0 : i32
    return %c0_i32, %c0_i32_0 : i32, i32
  }
  func.func @transform_4(%arg0: i32) -> (i32, i32) {
    %c0_i32 = arith.constant 0 : i32
    %c0_i32_0 = arith.constant 0 : i32
    %c0_i32_1 = arith.constant 0 : i32
    return %c0_i32, %c0_i32_0 : i32, i32
  }
  func.func @transform_5(%arg0: i32) -> (i32, i32) {
    %c0_i32 = arith.constant 0 : i32
    %c0_i32_0 = arith.constant 0 : i32
    %c0_i32_1 = arith.constant 0 : i32
    return %c0_i32, %c0_i32_0 : i32, i32
  }
  func.func @transform_6(%arg0: i32) -> (i32, i32) {
    %c0_i32 = arith.constant 0 : i32
    %c0_i32_0 = arith.constant 0 : i32
    %c0_i32_1 = arith.constant 0 : i32
    return %c0_i32, %c0_i32_0 : i32, i32
  }
  func.func @transform_7(%arg0: i32) -> (i32, i32) {
    %c0_i32 = arith.constant 0 : i32
    %c0_i32_0 = arith.constant 0 : i32
    %c0_i32_1 = arith.constant 0 : i32
    return %c0_i32, %c0_i32_0 : i32, i32
  }
  func.func @transform_8(%arg0: i32) -> (i32, i32) {
    %c0_i32 = arith.constant 0 : i32
    %c0_i32_0 = arith.constant 0 : i32
    %c0_i32_1 = arith.constant 0 : i32
    return %c0_i32, %c0_i32_0 : i32, i32
  }
  func.func @transform_9(%arg0: i32) -> (i32, i32) {
    %c0_i32 = arith.constant 0 : i32
    %c0_i32_0 = arith.constant 0 : i32
    return %arg0, %c0_i32 : i32, i32
  }
  func.func @transform_10(%arg0: i32) -> (i32, i32) {
    %c0_i32 = arith.constant 0 : i32
    %c0_i32_0 = arith.constant 0 : i32
    return %arg0, %c0_i32 : i32, i32
  }
  func.func @transform_11(%arg0: i32) -> (i32, i32) {
    %c0_i32 = arith.constant 0 : i32
    %c0_i32_0 = arith.constant 0 : i32
    return %arg0, %c0_i32 : i32, i32
  }
}

</mosaic_0001>

<llo_original>
// kernel: tpu_custom_call.1
$region0: #{tpu_custom_call.1}
  #allocation0 [shape = 'u32[]', space=smem, size = 0x4, offset = 0x4, fixed_abs, tag = 'smem constant byte address 0x4 - core index']
  #allocation1 [shape = 'u32[144,128]{1,0:T(1,128)}', space=vmem, size = 0x12000, scoped, tag = 'internal scratch']
  %s0 = inlined_call_operand.hbm [shape: f32[16,32], index: 0, kind: input, shape index: {}]
  %s1 = inlined_call_operand.hbm [shape: f32[16,32], index: 1, kind: input, shape index: {}]
  %s2 = inlined_call_operand.hbm [shape: f32[16,32], index: 2, kind: input, shape index: {}]
  %s3 = inlined_call_operand.hbm [shape: f32[32,32], index: 3, kind: input, shape index: {}]
  %s4 = inlined_call_operand.vmem [shape: f32[1,32], index: 4, kind: input, shape index: {}]
  %s5 = inlined_call_operand.hbm [shape: f32[32,32], index: 5, kind: input, shape index: {}]
  %s6 = inlined_call_operand.vmem [shape: f32[1,32], index: 6, kind: input, shape index: {}]
  %s7 = inlined_call_operand.hbm [shape: f32[32,32], index: 7, kind: input, shape index: {}]
  %s8 = inlined_call_operand.vmem [shape: f32[1,32], index: 8, kind: input, shape index: {}]
  %s9 = inlined_call_operand.hbm [shape: f32[16,32], index: 9, kind: output, shape index: {0}]
  %s10 = inlined_call_operand.hbm [shape: f32[16,32], index: 10, kind: output, shape index: {1}]
  %s11 = inlined_call_operand.hbm [shape: f32[16,32], index: 11, kind: output, shape index: {2}]
  %12 = xla_tuple %s9, %s10, %s11
  %s13 = sld [smem:[#allocation0]]
  $region86: #{tpu_custom_call.1} parent=0
    _
  %s15 = ssub.s32 1, %s13
  %s16 = scalar_select 0, %s15, %s13
  $region1: #{tpu_custom_call.1} parent=0
    #allocation2 [shape = 'u8[8192]{0}', space=vmem, size = 0x2000, scoped, tag = 'input window, operand 0, single buffered']
    #allocation3 [shape = 's32[1]{0}', space=sflag, size = 0x4, scoped, tag = 'scoped memory for tpu_custom_call.1']
    #allocation4 [shape = 's32[1]{0}', space=sflag, size = 0x4, scoped, tag = 'scoped memory for tpu_custom_call.1']
    #allocation5 [shape = 'u8[8192]{0}', space=vmem, size = 0x2000, scoped, tag = 'input window, operand 1, single buffered']
    #allocation6 [shape = 's32[1]{0}', space=sflag, size = 0x4, scoped, tag = 'scoped memory for tpu_custom_call.1']
    #allocation7 [shape = 'u8[8192]{0}', space=vmem, size = 0x2000, scoped, tag = 'input window, operand 2, single buffered']
    #allocation8 [shape = 'u8[16384]{0}', space=vmem, size = 0x4000, scoped, tag = 'input window, operand 3, single buffered']
    #allocation9 [shape = 's32[1]{0}', space=sflag, size = 0x4, scoped, tag = 'scoped memory for tpu_custom_call.1']
    #allocation10 [shape = 'u8[16384]{0}', space=vmem, size = 0x4000, scoped, tag = 'input window, operand 5, single buffered']
    #allocation11 [shape = 'u8[16384]{0}', space=vmem, size = 0x4000, scoped, tag = 'input window, operand 7, single buffered']
    #allocation12 [shape = 's32[1]{0}', space=sflag, size = 0x4, scoped, tag = 'scoped memory for tpu_custom_call.1']
    #allocation13 [shape = 'u8[8192]{0}', space=vmem, size = 0x2000, scoped, tag = 'output window, operand 0, single buffered']
    #allocation14 [shape = 'u8[8192]{0}', space=vmem, size = 0x2000, scoped, tag = 'output window, operand 1, single buffered']
    #allocation15 [shape = 's32[1]{0}', space=sflag, size = 0x4, scoped, tag = 'scoped memory for tpu_custom_call.1']
    #allocation16 [shape = 'u8[8192]{0}', space=vmem, size = 0x2000, scoped, tag = 'output window, operand 2, single buffered']
    %17 = vsyncpa [#allocation3], 0
    %18 = vsyncpa [#allocation6], 0
    %19 = vsyncpa [#allocation9], 0
    %20 = vsyncpa [#allocation12], 0
    %21 = vsyncpa [#allocation4], 0
    %22 = vsyncpa [#allocation15], 0
    // Predicated region
    $region2: #{tpu_custom_call.1} parent=1 // pred_check
      _
    $region3: #{tpu_custom_call.1} parent=1 // pred_check_branch
      %24 = sbr.rel (0) target = $region5
    $region4: #{tpu_custom_call.1} parent=1 // pred_region
      %s26 = ssub.s32 256, 256
      %27 = vsyncadd [#allocation3], %s26
      %s28 = sshll.u32 [#allocation2], 4
      %s29 = int_to_ptr.vmem [resolvable:$true] %s28
      %34 = dma.hbm_to_vmem [thread:$0]  %s0, 256, %s29, [#allocation3], 128, 128, 8
    $region5: #{tpu_custom_call.1} parent=1 // pred_fallthru
      _
    // Predicated region
    $region6: #{tpu_custom_call.1} parent=1 // pred_check
      _
    $region7: #{tpu_custom_call.1} parent=1 // pred_check_branch
      %36 = sbr.rel (0) target = $region9
    $region8: #{tpu_custom_call.1} parent=1 // pred_region
      %s38 = ssub.s32 256, 256
      %39 = vsyncadd [#allocation6], %s38
      %s40 = sshll.u32 [#allocation5], 4
      %s41 = int_to_ptr.vmem [resolvable:$true] %s40
      %46 = dma.hbm_to_vmem [thread:$0]  %s1, 256, %s41, [#allocation6], 128, 128, 8
    $region9: #{tpu_custom_call.1} parent=1 // pred_fallthru
      _
    // Predicated region
    $region10: #{tpu_custom_call.1} parent=1 // pred_check
      _
    $region11: #{tpu_custom_call.1} parent=1 // pred_check_branch
      %48 = sbr.rel (0) target = $region13
    $region12: #{tpu_custom_call.1} parent=1 // pred_region
      %s50 = ssub.s32 256, 256
      %51 = vsyncadd [#allocation6], %s50
      %s52 = sshll.u32 [#allocation7], 4
      %s53 = int_to_ptr.vmem [resolvable:$true] %s52
      %58 = dma.hbm_to_vmem [thread:$0]  %s2, 256, %s53, [#allocation6], 128, 128, 8
    $region13: #{tpu_custom_call.1} parent=1 // pred_fallthru
      _
    // Predicated region
    $region14: #{tpu_custom_call.1} parent=1 // pred_check
      _
    $region15: #{tpu_custom_call.1} parent=1 // pred_check_branch
      %60 = sbr.rel (0) target = $region17
    $region16: #{tpu_custom_call.1} parent=1 // pred_region
      %s62 = ssub.s32 512, 512
      %63 = vsyncadd [#allocation9], %s62
      %s64 = sshll.u32 [#allocation8], 4
      %s65 = int_to_ptr.vmem [resolvable:$true] %s64
      %70 = dma.hbm_to_vmem [thread:$0]  %s3, 512, %s65, [#allocation9], 128, 128, 8
    $region17: #{tpu_custom_call.1} parent=1 // pred_fallthru
      _
    // Predicated region
    $region18: #{tpu_custom_call.1} parent=1 // pred_check
      _
    $region19: #{tpu_custom_call.1} parent=1 // pred_check_branch
      %72 = sbr.rel (0) target = $region21
    $region20: #{tpu_custom_call.1} parent=1 // pred_region
      _
    $region21: #{tpu_custom_call.1} parent=1 // pred_fallthru
      _
    // Predicated region
    $region22: #{tpu_custom_call.1} parent=1 // pred_check
      _
    $region23: #{tpu_custom_call.1} parent=1 // pred_check_branch
      %74 = sbr.rel (0) target = $region25
    $region24: #{tpu_custom_call.1} parent=1 // pred_region
      %s76 = ssub.s32 512, 512
      %77 = vsyncadd [#allocation9], %s76
      %s78 = sshll.u32 [#allocation10], 4
      %s79 = int_to_ptr.vmem [resolvable:$true] %s78
      %84 = dma.hbm_to_vmem [thread:$0]  %s5, 512, %s79, [#allocation9], 128, 128, 8
    $region25: #{tpu_custom_call.1} parent=1 // pred_fallthru
      _
    // Predicated region
    $region26: #{tpu_custom_call.1} parent=1 // pred_check
      _
    $region27: #{tpu_custom_call.1} parent=1 // pred_check_branch
      %86 = sbr.rel (0) target = $region29
    $region28: #{tpu_custom_call.1} parent=1 // pred_region
      _
    $region29: #{tpu_custom_call.1} parent=1 // pred_fallthru
      _
    // Predicated region
    $region30: #{tpu_custom_call.1} parent=1 // pred_check
      _
    $region31: #{tpu_custom_call.1} parent=1 // pred_check_branch
      %88 = sbr.rel (0) target = $region33
    $region32: #{tpu_custom_call.1} parent=1 // pred_region
      %s90 = ssub.s32 512, 512
      %91 = vsyncadd [#allocation12], %s90
      %s92 = sshll.u32 [#allocation11], 4
      %s93 = int_to_ptr.vmem [resolvable:$true] %s92
      %98 = dma.hbm_to_vmem [thread:$0]  %s7, 512, %s93, [#allocation12], 128, 128, 8
    $region33: #{tpu_custom_call.1} parent=1 // pred_fallthru
      _
    // Predicated region
    $region34: #{tpu_custom_call.1} parent=1 // pred_check
      _
    $region35: #{tpu_custom_call.1} parent=1 // pred_check_branch
      %100 = sbr.rel (0) target = $region37
    $region36: #{tpu_custom_call.1} parent=1 // pred_region
      _
    $region37: #{tpu_custom_call.1} parent=1 // pred_fallthru
      _
    // Predicated region
    $region38: #{tpu_custom_call.1} parent=1 // pred_check
      _
    $region39: #{tpu_custom_call.1} parent=1 // pred_check_branch
      %102 = sbr.rel (0) target = $region41
    $region40: #{tpu_custom_call.1} parent=1 // pred_region
      %103 = dma.done [#allocation3], 256
    $region41: #{tpu_custom_call.1} parent=1 // pred_fallthru
      _
    // Predicated region
    $region42: #{tpu_custom_call.1} parent=1 // pred_check
      _
    $region43: #{tpu_custom_call.1} parent=1 // pred_check_branch
      %105 = sbr.rel (0) target = $region45
    $region44: #{tpu_custom_call.1} parent=1 // pred_region
      %106 = dma.done [#allocation6], 256
    $region45: #{tpu_custom_call.1} parent=1 // pred_fallthru
      _
    // Predicated region
    $region46: #{tpu_custom_call.1} parent=1 // pred_check
      _
    $region47: #{tpu_custom_call.1} parent=1 // pred_check_branch
      %108 = sbr.rel (0) target = $region49
    $region48: #{tpu_custom_call.1} parent=1 // pred_region
      %109 = dma.done [#allocation6], 256
    $region49: #{tpu_custom_call.1} parent=1 // pred_fallthru
      _
    // Predicated region
    $region50: #{tpu_custom_call.1} parent=1 // pred_check
      _
    $region51: #{tpu_custom_call.1} parent=1 // pred_check_branch
      %111 = sbr.rel (0) target = $region53
    $region52: #{tpu_custom_call.1} parent=1 // pred_region
      %112 = dma.done [#allocation9], 512
    $region53: #{tpu_custom_call.1} parent=1 // pred_fallthru
      _
    // Predicated region
    $region54: #{tpu_custom_call.1} parent=1 // pred_check
      _
    $region55: #{tpu_custom_call.1} parent=1 // pred_check_branch
      %114 = sbr.rel (0) target = $region57
    $region56: #{tpu_custom_call.1} parent=1 // pred_region
      %115 = dma.done [#allocation9], 512
    $region57: #{tpu_custom_call.1} parent=1 // pred_fallthru
      _
    // Predicated region
    $region58: #{tpu_custom_call.1} parent=1 // pred_check
      _
    $region59: #{tpu_custom_call.1} parent=1 // pred_check_branch
      %117 = sbr.rel (0) target = $region61
    $region60: #{tpu_custom_call.1} parent=1 // pred_region
      %118 = dma.done [#allocation12], 512
    $region61: #{tpu_custom_call.1} parent=1 // pred_fallthru
      _
    %v119 = vld [vmem:[#allocation2] sm:$0xff]
    %v120 = vld [vmem:[#allocation2 + $0x8] sm:$0xff]
    %v121 = vld [vmem:[#allocation8] sm:$0xff]
    %v122 = vld [vmem:[#allocation8 + $0x8] sm:$0xff]
    %v123 = vld [vmem:[#allocation8 + $0x10] sm:$0xff]
    %v124 = vld [vmem:[#allocation8 + $0x18] sm:$0xff]
    %v125 = vld [vmem:[%s4] sm:$0x1]
    %v127 = vlaneseq
    %v128 = vshrl.u32 %v127, 7
    %v129 = vsub.s32 0, %v128
    %v130 = vrot.slane %v125, %v129
    %vm132 = vcmask 261120
    %v134 = vsel %vm132, %v119, 0
    %v137 = vsel %vm132, %v120, 0
    %139 = vmatprep.subr.mxu0 0.0
    %140 = vmatpush1.msra.mxu0 0.0
    %141 = vmatprep.subr.mxu0 0.0
    %142 = vmatpush1.msra.mxu0 0.0
    %143 = vmatprep.subr.mxu0 0.0
    %144 = vmatpush1.msra.mxu0 0.0
    %145 = vmatprep.subr.mxu0 0.0
    %146 = vmatpush1.msra.mxu0 0.0
    %147 = vmatprep.subr.mxu0 0.0
    %148 = vmatpush1.msra.mxu0 0.0
    %149 = vmatprep.subr.mxu0 0.0
    %150 = vmatpush1.msra.mxu0 0.0
    %151 = vmatprep.subr.mxu0 0.0
    %152 = vmatpush1.msra.mxu0 0.0
    %153 = vmatprep.subr.mxu0 0.0
    %154 = vmatpush1.msra.mxu0 0.0
    %155 = vmatprep.subr.mxu0 0.0
    %156 = vmatpush1.msra.mxu0 0.0
    %157 = vmatprep.subr.mxu0 0.0
    %158 = vmatpush1.msra.mxu0 0.0
    %159 = vmatprep.subr.mxu0 0.0
    %160 = vmatpush1.msra.mxu0 0.0
    %161 = vmatprep.subr.mxu0 0.0
    %162 = vmatpush1.msra.mxu0 0.0
    %163 = vmatprep.subr.mxu0 0.0
    %164 = vmatpush1.msra.mxu0 %v124
    %165 = vmatprep.subr.mxu0 0.0
    %166 = vmatpush1.msra.mxu0 %v123
    %167 = vmatprep.subr.mxu0 0.0
    %168 = vmatpush1.msra.mxu0 %v122
    %169 = vmatprep.subr.mxu0 0.0
    %170 = vmatpush1.msra.mxu0 %v121
    %171 = vmatprep.subr.mxu0 0.0
    %172 = vmatpush2.msra.mxu0 0.0
    %173 = vmatprep.subr.mxu0 0.0
    %174 = vmatpush2.msra.mxu0 0.0
    %175 = vmatprep.subr.mxu0 0.0
    %176 = vmatpush2.msra.mxu0 0.0
    %177 = vmatprep.subr.mxu0 0.0
    %178 = vmatpush2.msra.mxu0 0.0
    %179 = vmatprep.subr.mxu0 0.0
    %180 = vmatpush2.msra.mxu0 0.0
    %181 = vmatprep.subr.mxu0 0.0
    %182 = vmatpush2.msra.mxu0 0.0
    %183 = vmatprep.subr.mxu0 0.0
    %184 = vmatpush2.msra.mxu0 0.0
    %185 = vmatprep.subr.mxu0 0.0
    %186 = vmatpush2.msra.mxu0 0.0
    %187 = vmatprep.subr.mxu0 0.0
    %188 = vmatpush2.msra.mxu0 0.0
    %189 = vmatprep.subr.mxu0 0.0
    %190 = vmatpush2.msra.mxu0 0.0
    %191 = vmatprep.subr.mxu0 0.0
    %192 = vmatpush2.msra.mxu0 0.0
    %193 = vmatprep.subr.mxu0 0.0
    %194 = vmatpush2.msra.mxu0 0.0
    %195 = vmatprep.subr.mxu0 0.0
    %196 = vmatpush2.msra.mxu0 0.0
    %197 = vmatprep.subr.mxu0 0.0
    %198 = vmatpush2.msra.mxu0 0.0
    %199 = vmatprep.subr.mxu0 0.0
    %200 = vmatpush2.msra.mxu0 0.0
    %201 = vmatprep.subr.mxu0 0.0
    %202 = vmatpush2.msra.mxu0 0.0
    %203 = vmatprep.mubr.f32.mxu0 0.0
    %204 = vmatmul.mubr.f32.gmra.mxu0 %v134
    %v205 = vpop.f32.mrf.mxu0
    %v206 = vadd.f32 %v130, %v205
    %v207 = vpop.f32.mrf.mxu0
    %208 = vmatprep.mubr.f32.mxu0 0.0
    %209 = vmatmul.mubr.f32.gmra.mxu0 %v137
    %v210 = vpop.f32.mrf.mxu0
    %v211 = vadd.f32 %v130, %v210
    %v212 = vpop.f32.mrf.mxu0
    %213 = vdwg.mxu0
    %214 = vst.msk [vmem:[#allocation13] sm:$0xff] %vm132, %v206
    %215 = vst.msk [vmem:[#allocation13 + $0x8] sm:$0xff] %vm132, %v211
    %v216 = vld [vmem:[#allocation5] sm:$0xff]
    %v217 = vld [vmem:[#allocation5 + $0x8] sm:$0xff]
    %v218 = vld [vmem:[#allocation10] sm:$0xff]
    %v219 = vld [vmem:[#allocation10 + $0x8] sm:$0xff]
    %v220 = vld [vmem:[#allocation10 + $0x10] sm:$0xff]
    %v221 = vld [vmem:[#allocation10 + $0x18] sm:$0xff]
    %v222 = vld [vmem:[%s6] sm:$0x1]
    %v224 = vlaneseq
    %v225 = vshrl.u32 %v224, 7
    %v226 = vsub.s32 0, %v225
    %v227 = vrot.slane %v222, %v226
    %v230 = vsel %vm132, %v216, 0
    %v233 = vsel %vm132, %v217, 0
    %235 = vmatprep.subr.mxu0 0.0
    %236 = vmatpush1.msra.mxu0 0.0
    %237 = vmatprep.subr.mxu0 0.0
    %238 = vmatpush1.msra.mxu0 0.0
    %239 = vmatprep.subr.mxu0 0.0
    %240 = vmatpush1.msra.mxu0 0.0
    %241 = vmatprep.subr.mxu0 0.0
    %242 = vmatpush1.msra.mxu0 0.0
    %243 = vmatprep.subr.mxu0 0.0
    %244 = vmatpush1.msra.mxu0 0.0
    %245 = vmatprep.subr.mxu0 0.0
    %246 = vmatpush1.msra.mxu0 0.0
    %247 = vmatprep.subr.mxu0 0.0
    %248 = vmatpush1.msra.mxu0 0.0
    %249 = vmatprep.subr.mxu0 0.0
    %250 = vmatpush1.msra.mxu0 0.0
    %251 = vmatprep.subr.mxu0 0.0
    %252 = vmatpush1.msra.mxu0 0.0
    %253 = vmatprep.subr.mxu0 0.0
    %254 = vmatpush1.msra.mxu0 0.0
    %255 = vmatprep.subr.mxu0 0.0
    %256 = vmatpush1.msra.mxu0 0.0
    %257 = vmatprep.subr.mxu0 0.0
    %258 = vmatpush1.msra.mxu0 0.0
    %259 = vmatprep.subr.mxu0 0.0
    %260 = vmatpush1.msra.mxu0 %v221
    %261 = vmatprep.subr.mxu0 0.0
    %262 = vmatpush1.msra.mxu0 %v220
    %263 = vmatprep.subr.mxu0 0.0
    %264 = vmatpush1.msra.mxu0 %v219
    %265 = vmatprep.subr.mxu0 0.0
    %266 = vmatpush1.msra.mxu0 %v218
    %267 = vmatprep.subr.mxu0 0.0
    %268 = vmatpush2.msra.mxu0 0.0
    %269 = vmatprep.subr.mxu0 0.0
    %270 = vmatpush2.msra.mxu0 0.0
    %271 = vmatprep.subr.mxu0 0.0
    %272 = vmatpush2.msra.mxu0 0.0
    %273 = vmatprep.subr.mxu0 0.0
    %274 = vmatpush2.msra.mxu0 0.0
    %275 = vmatprep.subr.mxu0 0.0
    %276 = vmatpush2.msra.mxu0 0.0
    %277 = vmatprep.subr.mxu0 0.0
    %278 = vmatpush2.msra.mxu0 0.0
    %279 = vmatprep.subr.mxu0 0.0
    %280 = vmatpush2.msra.mxu0 0.0
    %281 = vmatprep.subr.mxu0 0.0
    %282 = vmatpush2.msra.mxu0 0.0
    %283 = vmatprep.subr.mxu0 0.0
    %284 = vmatpush2.msra.mxu0 0.0
    %285 = vmatprep.subr.mxu0 0.0
    %286 = vmatpush2.msra.mxu0 0.0
    %287 = vmatprep.subr.mxu0 0.0
    %288 = vmatpush2.msra.mxu0 0.0
    %289 = vmatprep.subr.mxu0 0.0
    %290 = vmatpush2.msra.mxu0 0.0
    %291 = vmatprep.subr.mxu0 0.0
    %292 = vmatpush2.msra.mxu0 0.0
    %293 = vmatprep.subr.mxu0 0.0
    %294 = vmatpush2.msra.mxu0 0.0
    %295 = vmatprep.subr.mxu0 0.0
    %296 = vmatpush2.msra.mxu0 0.0
    %297 = vmatprep.subr.mxu0 0.0
    %298 = vmatpush2.msra.mxu0 0.0
    %299 = vmatprep.mubr.f32.mxu0 0.0
    %300 = vmatmul.mubr.f32.gmra.mxu0 %v230
    %v301 = vpop.f32.mrf.mxu0
    %v302 = vadd.f32 %v227, %v301
    %v303 = vpop.f32.mrf.mxu0
    %304 = vmatprep.mubr.f32.mxu0 0.0
    %305 = vmatmul.mubr.f32.gmra.mxu0 %v233
    %v306 = vpop.f32.mrf.mxu0
    %v307 = vadd.f32 %v227, %v306
    %v308 = vpop.f32.mrf.mxu0
    %309 = vdwg.mxu0
    %310 = vst.msk [vmem:[#allocation14] sm:$0xff] %vm132, %v302
    %311 = vst.msk [vmem:[#allocation14 + $0x8] sm:$0xff] %vm132, %v307
    %v312 = vld [vmem:[#allocation7] sm:$0xff]
    %v313 = vld [vmem:[#allocation7 + $0x8] sm:$0xff]
    %v314 = vld [vmem:[#allocation11] sm:$0xff]
    %v315 = vld [vmem:[#allocation11 + $0x8] sm:$0xff]
    %v316 = vld [vmem:[#allocation11 + $0x10] sm:$0xff]
    %v317 = vld [vmem:[#allocation11 + $0x18] sm:$0xff]
    %v318 = vld [vmem:[%s8] sm:$0x1]
    %v320 = vlaneseq
    %v321 = vshrl.u32 %v320, 7
    %v322 = vsub.s32 0, %v321
    %v323 = vrot.slane %v318, %v322
    %v326 = vsel %vm132, %v312, 0
    %v329 = vsel %vm132, %v313, 0
    %331 = vmatprep.subr.mxu0 0.0
    %332 = vmatpush1.msra.mxu0 0.0
    %333 = vmatprep.subr.mxu0 0.0
    %334 = vmatpush1.msra.mxu0 0.0
    %335 = vmatprep.subr.mxu0 0.0
    %336 = vmatpush1.msra.mxu0 0.0
    %337 = vmatprep.subr.mxu0 0.0
    %338 = vmatpush1.msra.mxu0 0.0
    %339 = vmatprep.subr.mxu0 0.0
    %340 = vmatpush1.msra.mxu0 0.0
    %341 = vmatprep.subr.mxu0 0.0
    %342 = vmatpush1.msra.mxu0 0.0
    %343 = vmatprep.subr.mxu0 0.0
    %344 = vmatpush1.msra.mxu0 0.0
    %345 = vmatprep.subr.mxu0 0.0
    %346 = vmatpush1.msra.mxu0 0.0
    %347 = vmatprep.subr.mxu0 0.0
    %348 = vmatpush1.msra.mxu0 0.0
    %349 = vmatprep.subr.mxu0 0.0
    %350 = vmatpush1.msra.mxu0 0.0
    %351 = vmatprep.subr.mxu0 0.0
    %352 = vmatpush1.msra.mxu0 0.0
    %353 = vmatprep.subr.mxu0 0.0
    %354 = vmatpush1.msra.mxu0 0.0
    %355 = vmatprep.subr.mxu0 0.0
    %356 = vmatpush1.msra.mxu0 %v317
    %357 = vmatprep.subr.mxu0 0.0
    %358 = vmatpush1.msra.mxu0 %v316
    %359 = vmatprep.subr.mxu0 0.0
    %360 = vmatpush1.msra.mxu0 %v315
    %361 = vmatprep.subr.mxu0 0.0
    %362 = vmatpush1.msra.mxu0 %v314
    %363 = vmatprep.subr.mxu0 0.0
    %364 = vmatpush2.msra.mxu0 0.0
    %365 = vmatprep.subr.mxu0 0.0
    %366 = vmatpush2.msra.mxu0 0.0
    %367 = vmatprep.subr.mxu0 0.0
    %368 = vmatpush2.msra.mxu0 0.0
    %369 = vmatprep.subr.mxu0 0.0
    %370 = vmatpush2.msra.mxu0 0.0
    %371 = vmatprep.subr.mxu0 0.0
    %372 = vmatpush2.msra.mxu0 0.0
    %373 = vmatprep.subr.mxu0 0.0
    %374 = vmatpush2.msra.mxu0 0.0
    %375 = vmatprep.subr.mxu0 0.0
    %376 = vmatpush2.msra.mxu0 0.0
    %377 = vmatprep.subr.mxu0 0.0
    %378 = vmatpush2.msra.mxu0 0.0
    %379 = vmatprep.subr.mxu0 0.0
    %380 = vmatpush2.msra.mxu0 0.0
    %381 = vmatprep.subr.mxu0 0.0
    %382 = vmatpush2.msra.mxu0 0.0
    %383 = vmatprep.subr.mxu0 0.0
    %384 = vmatpush2.msra.mxu0 0.0
    %385 = vmatprep.subr.mxu0 0.0
    %386 = vmatpush2.msra.mxu0 0.0
    %387 = vmatprep.subr.mxu0 0.0
    %388 = vmatpush2.msra.mxu0 0.0
    %389 = vmatprep.subr.mxu0 0.0
    %390 = vmatpush2.msra.mxu0 0.0
    %391 = vmatprep.subr.mxu0 0.0
    %392 = vmatpush2.msra.mxu0 0.0
    %393 = vmatprep.subr.mxu0 0.0
    %394 = vmatpush2.msra.mxu0 0.0
    %395 = vmatprep.mubr.f32.mxu0 0.0
    %396 = vmatmul.mubr.f32.gmra.mxu0 %v326
    %v397 = vpop.f32.mrf.mxu0
    %v398 = vadd.f32 %v323, %v397
    %v399 = vpop.f32.mrf.mxu0
    %400 = vmatprep.mubr.f32.mxu0 0.0
    %401 = vmatmul.mubr.f32.gmra.mxu0 %v329
    %v402 = vpop.f32.mrf.mxu0
    %v403 = vadd.f32 %v323, %v402
    %v404 = vpop.f32.mrf.mxu0
    %405 = vdwg.mxu0
    %406 = vst.msk [vmem:[#allocation16] sm:$0xff] %vm132, %v398
    %407 = vst.msk [vmem:[#allocation16 + $0x8] sm:$0xff] %vm132, %v403
    // Predicated region
    $region62: #{tpu_custom_call.1} parent=1 // pred_check
      _
    $region63: #{tpu_custom_call.1} parent=1 // pred_check_branch
      %409 = sbr.rel (0) target = $region65
    $region64: #{tpu_custom_call.1} parent=1 // pred_region
      %s411 = ssub.s32 256, 256
      %412 = vsyncadd [#allocation4], %s411
      %s413 = sshll.u32 [#allocation13], 4
      %s414 = int_to_ptr.vmem [resolvable:$true] %s413
      %419 = dma.vmem_to_hbm [thread:$0]  %s414, 256, %s9, [#allocation4], 128, 128, 8
    $region65: #{tpu_custom_call.1} parent=1 // pred_fallthru
      _
    // Predicated region
    $region66: #{tpu_custom_call.1} parent=1 // pred_check
      _
    $region67: #{tpu_custom_call.1} parent=1 // pred_check_branch
      %421 = sbr.rel (0) target = $region69
    $region68: #{tpu_custom_call.1} parent=1 // pred_region
      %s423 = ssub.s32 256, 256
      %424 = vsyncadd [#allocation15], %s423
      %s425 = sshll.u32 [#allocation14], 4
      %s426 = int_to_ptr.vmem [resolvable:$true] %s425
      %431 = dma.vmem_to_hbm [thread:$0]  %s426, 256, %s10, [#allocation15], 128, 128, 8
    $region69: #{tpu_custom_call.1} parent=1 // pred_fallthru
      _
    // Predicated region
    $region70: #{tpu_custom_call.1} parent=1 // pred_check
      _
    $region71: #{tpu_custom_call.1} parent=1 // pred_check_branch
      %433 = sbr.rel (0) target = $region73
    $region72: #{tpu_custom_call.1} parent=1 // pred_region
      %s435 = ssub.s32 256, 256
      %436 = vsyncadd [#allocation15], %s435
      %s437 = sshll.u32 [#allocation16], 4
      %s438 = int_to_ptr.vmem [resolvable:$true] %s437
      %443 = dma.vmem_to_hbm [thread:$0]  %s438, 256, %s11, [#allocation15], 128, 128, 8
    $region73: #{tpu_custom_call.1} parent=1 // pred_fallthru
      _
    // Predicated region
    $region74: #{tpu_custom_call.1} parent=1 // pred_check
      _
    $region75: #{tpu_custom_call.1} parent=1 // pred_check_branch
      %445 = sbr.rel (0) target = $region77
    $region76: #{tpu_custom_call.1} parent=1 // pred_region
      %446 = dma.done [#allocation4], 256
    $region77: #{tpu_custom_call.1} parent=1 // pred_fallthru
      _
    // Predicated region
    $region78: #{tpu_custom_call.1} parent=1 // pred_check
      _
    $region79: #{tpu_custom_call.1} parent=1 // pred_check_branch
      %448 = sbr.rel (0) target = $region81
    $region80: #{tpu_custom_call.1} parent=1 // pred_region
      %449 = dma.done [#allocation15], 256
    $region81: #{tpu_custom_call.1} parent=1 // pred_fallthru
      _
    // Predicated region
    $region82: #{tpu_custom_call.1} parent=1 // pred_check
      _
    $region83: #{tpu_custom_call.1} parent=1 // pred_check_branch
      %451 = sbr.rel (0) target = $region85
    $region84: #{tpu_custom_call.1} parent=1 // pred_region
      %452 = dma.done [#allocation15], 256
    $region85: #{tpu_custom_call.1} parent=1 // pred_fallthru
      _
    %453 = vsyncpa [#allocation3], 1
    %454 = vsyncpa [#allocation6], 1
    %455 = vsyncpa [#allocation9], 1
    %456 = vsyncpa [#allocation12], 1
    %457 = vsyncpa [#allocation4], 1
    %458 = vsyncpa [#allocation15], 1

</llo_original>
